<compile_context>
chip_gen: v5e
topology: v5e:2x2
jax: 0.10.0
libtpu: 0.0.40
codegen_flags: <defaults>
</compile_context>

<pallas_src>
import functools

import jax
import jax.numpy as jnp
from jax.experimental import pallas as pl
from jax.experimental.pallas import tpu as pltpu


def _mlp_kernel(x_ref, w1_ref, b1_ref, w2t_ref, b2_ref, o_ref):
    # Layouts (batch on the lane axis):
    #   x:    [D_in, B_tile]
    #   w1:   [H, D_in]        b1: [H, 1]
    #   w2_t: [H, D_out]       b2: [D_out, 1]
    #   o:    [D_out, B_tile]
    x = x_ref[...]
    w1 = w1_ref[...]
    d_in = w1.shape[1]
    d_out = w2t_ref.shape[1]

    # ---- Layer 1: h = sigmoid(W1 @ x + b1) ----
    if d_in <= 8:
        # K is tiny (2 for XOR): unrolled VPU FMAs via broadcasted outer
        # products -- exact f32, no MXU push/pop latency for a >98%-padded tile.
        acc = w1[:, 0:1] * x[0:1, :]
        for k in range(1, d_in):
            acc = acc + w1[:, k:k + 1] * x[k:k + 1, :]
    else:
        acc = jnp.dot(w1, x, preferred_element_type=jnp.float32,
                      precision=jax.lax.Precision.HIGHEST)
    h = jax.nn.sigmoid(acc + b1_ref[...])                      # [H, B_tile]

    # ---- Layer 2: y = sigmoid(W2 @ h + b2) ----
    w2t = w2t_ref[...]
    if d_out <= 8:
        # N is tiny (1 for XOR): per-output cross-sublane reduce on the XLU.
        rows = [jnp.sum(w2t[:, j:j + 1] * h, axis=0, keepdims=True)
                for j in range(d_out)]
        y = rows[0] if d_out == 1 else jnp.concatenate(rows, axis=0)
    else:
        y = jax.lax.dot_general(w2t, h, (((0,), (0,)), ((), ())),
                                preferred_element_type=jnp.float32,
                                precision=jax.lax.Precision.HIGHEST)
    o_ref[...] = jax.nn.sigmoid(y + b2_ref[...]).astype(o_ref.dtype)


def prepare_params(w1, b1, w2, b2):
    """One-time parameter prep (hoisted out of the per-call forward path).

    w1: [H, D_in], b1: [H], w2: [D_out, H], b2: [D_out]  (PyTorch nn.Linear).
    Weights kept in the [features, ...] layout the lane-dense kernel wants.
    """
    w1 = jnp.asarray(w1, jnp.float32)                           # [H, D_in]
    w2 = jnp.asarray(w2, jnp.float32)                           # [D_out, H]
    return {
        "w1": w1,
        "b1": jnp.asarray(b1, jnp.float32).reshape(-1, 1),      # [H, 1]
        "w2_t": w2.T,                                           # [H, D_out]
        "b2": jnp.asarray(b2, jnp.float32).reshape(-1, 1),      # [D_out, 1]
    }


# Whole-array operand, resident in VMEM (no tiling, no index_map).
_VMEM_FULL = pl.BlockSpec(memory_space=pltpu.MemorySpace.VMEM)

# Below this the whole problem is a few KiB: one grid-free invocation.
_SMALL_BATCH_MAX = 1024


def _pick_batch_tile(batch):
    """Large tile (amortize ~0.35us/step), but keep >= 2 grid steps for v7x."""
    tile = 4096
    while tile > 128 and pl.cdiv(batch, tile) < 2:
        tile //= 2
    return tile


@functools.partial(jax.jit, static_argnames=("batch_tile",))
def hello_xor_forward(x, params, *, batch_tile=None):
    """x: [B, D_in] float32; params from prepare_params. Returns [B, D_out]."""
    x = jnp.asarray(x, jnp.float32)
    batch = x.shape[0]
    w1, b1 = params["w1"], params["b1"]
    w2_t, b2 = params["w2_t"], params["b2"]
    d_in = w1.shape[1]
    d_out = w2_t.shape[1]

    x_t = x.T                                                   # [D_in, B]

    if batch <= _SMALL_BATCH_MAX:
        # Tiny problem (classic XOR batch=4 up to ~1K rows): grid-free, all
        # operands (< a few hundred KiB) VMEM-resident, no per-step overhead.
        # TODO(synk): for the literal batch=4 XOR case plain jnp would beat
        # pallas_call dispatch overhead; kept in Pallas to exercise the kernel.
        out_t = pl.pallas_call(
            _mlp_kernel,
            out_shape=jax.ShapeDtypeStruct((d_out, batch), jnp.float32),
            in_specs=[_VMEM_FULL] * 5,
            out_specs=_VMEM_FULL,
        )(x_t, w1, b1, w2_t, b2)
        return out_t.T

    # Scaled-batch path: 1-D grid over lane-axis batch tiles; tiny weights /
    # biases stay VMEM-resident via constant index_maps (never re-fetched).
    tile = _pick_batch_tile(batch) if batch_tile is None else batch_tile
    tile = max(128, ((tile + 127) // 128) * 128)                # lane-aligned
    num_tiles = pl.cdiv(batch, tile)
    batch_pad = num_tiles * tile
    if batch_pad != batch:
        x_t = jnp.pad(x_t, ((0, 0), (0, batch_pad - batch)))

    const2d = lambda i: (0, 0)
    out_t = pl.pallas_call(
        _mlp_kernel,
        out_shape=jax.ShapeDtypeStruct((d_out, batch_pad), jnp.float32),
        grid=(num_tiles,),
        in_specs=[
            pl.BlockSpec((d_in, tile), lambda i: (0, i)),
            pl.BlockSpec(w1.shape, const2d),
            pl.BlockSpec(b1.shape, const2d),
            pl.BlockSpec(w2_t.shape, const2d),
            pl.BlockSpec(b2.shape, const2d),
        ],
        out_specs=pl.BlockSpec((d_out, tile), lambda i: (0, i)),
        compiler_params=pltpu.CompilerParams(
            dimension_semantics=("parallel",)),
    )(x_t, w1, b1, w2_t, b2)
    return out_t[:, :batch].T


def reference_forward(x, w1, b1, w2, b2):
    hp = jax.lax.Precision.HIGHEST
    h = jax.nn.sigmoid(jnp.dot(x, w1.T, precision=hp) + b1)
    return jax.nn.sigmoid(jnp.dot(h, w2.T, precision=hp) + b2)


if __name__ == "__main__":
    # XOR problem sizes: input_size=2, hidden_size=32, output_size=1, batch=4.
    input_size, hidden_size, output_size, batch = 2, 32, 1, 4

    key = jax.random.PRNGKey(0)
    k1, k2, k3, k4, kx = jax.random.split(key, 5)

    # Deterministic init (mimics nn.Linear uniform(-1/sqrt(fan_in), +1/sqrt(fan_in))).
    bound1 = 1.0 / (input_size ** 0.5)
    bound2 = 1.0 / (hidden_size ** 0.5)
    w1 = jax.random.uniform(k1, (hidden_size, input_size), jnp.float32, -bound1, bound1)
    b1 = jax.random.uniform(k2, (hidden_size,), jnp.float32, -bound1, bound1)
    w2 = jax.random.uniform(k3, (output_size, hidden_size), jnp.float32, -bound2, bound2)
    b2 = jax.random.uniform(k4, (output_size,), jnp.float32, -bound2, bound2)

    params = prepare_params(w1, b1, w2, b2)   # one-time prep, outside hot path

    # --- Small-batch (classic XOR) path: grid-free, VMEM-resident ---
    x = jnp.array([[0.0, 0.0], [0.0, 1.0], [1.0, 0.0], [1.0, 1.0]], jnp.float32)
    out = jax.block_until_ready(hello_xor_forward(x, params))
    ref = reference_forward(x, w1, b1, w2, b2)
    assert out.shape == (batch, output_size)
    assert jnp.allclose(out, ref, atol=1e-5, rtol=1e-5), (out, ref)

    # --- Scaled-batch path: auto tile, padded non-divisible batch, >=2 steps ---
    big_batch = 2500
    xb = jax.random.uniform(kx, (big_batch, input_size), jnp.float32)
    out_b = jax.block_until_ready(hello_xor_forward(xb, params))
    ref_b = reference_forward(xb, w1, b1, w2, b2)
    assert out_b.shape == (big_batch, output_size)
    assert jnp.allclose(out_b, ref_b, atol=1e-5, rtol=1e-5)

    # --- Scaled-batch path with an explicit tile (exercises padding + grid=3) ---
    out_c = jax.block_until_ready(hello_xor_forward(xb, params, batch_tile=512))
    assert jnp.allclose(out_c, ref_b, atol=1e-5, rtol=1e-5)

    print("KERNEL_OK")
</pallas_src>

<mosaic_0001>
module attributes {stable_mosaic.version = 11 : i64} {
  func.func @_mlp_kernel(%arg0: memref<2x4xf32, #tpu.memory_space<vmem>>, %arg1: memref<32x2xf32, #tpu.memory_space<vmem>>, %arg2: memref<32x1xf32, #tpu.memory_space<vmem>>, %arg3: memref<32x1xf32, #tpu.memory_space<vmem>>, %arg4: memref<1x1xf32, #tpu.memory_space<vmem>>, %arg5: memref<1x4xf32, #tpu.memory_space<vmem>>) attributes {dimension_semantics = [], scalar_prefetch = 0 : i64, scratch_operands = 0 : i64, tpu.core_type = #tpu.core_type<tc>} {
    %c0 = arith.constant 0 : index
    %c0_0 = arith.constant 0 : index
    %0 = vector.load %arg0[%c0, %c0_0] : memref<2x4xf32, #tpu.memory_space<vmem>>, vector<2x4xf32>
    %c0_1 = arith.constant 0 : index
    %c0_2 = arith.constant 0 : index
    %1 = vector.load %arg1[%c0_1, %c0_2] : memref<32x2xf32, #tpu.memory_space<vmem>>, vector<32x2xf32>
    %2 = vector.extract_strided_slice %1 {offsets = [0, 0], sizes = [32, 1], strides = [1, 1]} : vector<32x2xf32> to vector<32x1xf32>
    %3 = vector.extract_strided_slice %0 {offsets = [0, 0], sizes = [1, 4], strides = [1, 1]} : vector<2x4xf32> to vector<1x4xf32>
    %4 = vector.broadcast %2 : vector<32x1xf32> to vector<32x4xf32>
    %5 = vector.broadcast %3 : vector<1x4xf32> to vector<32x4xf32>
    %6 = arith.mulf %4, %5 : vector<32x4xf32>
    %7 = vector.extract_strided_slice %1 {offsets = [0, 1], sizes = [32, 1], strides = [1, 1]} : vector<32x2xf32> to vector<32x1xf32>
    %8 = vector.extract_strided_slice %0 {offsets = [1, 0], sizes = [1, 4], strides = [1, 1]} : vector<2x4xf32> to vector<1x4xf32>
    %9 = vector.broadcast %7 : vector<32x1xf32> to vector<32x4xf32>
    %10 = vector.broadcast %8 : vector<1x4xf32> to vector<32x4xf32>
    %11 = arith.mulf %9, %10 : vector<32x4xf32>
    %12 = arith.addf %6, %11 : vector<32x4xf32>
    %c0_3 = arith.constant 0 : index
    %c0_4 = arith.constant 0 : index
    %13 = vector.load %arg2[%c0_3, %c0_4] : memref<32x1xf32, #tpu.memory_space<vmem>>, vector<32x1xf32>
    %14 = vector.broadcast %13 : vector<32x1xf32> to vector<32x4xf32>
    %15 = arith.addf %12, %14 : vector<32x4xf32>
    %16 = arith.negf %15 : vector<32x4xf32>
    %17 = math.exp %16 : vector<32x4xf32>
    %cst = arith.constant 1.000000e+00 : f32
    %18 = vector.broadcast %cst : f32 to vector<32x4xf32>
    %19 = arith.addf %18, %17 : vector<32x4xf32>
    %20 = arith.divf %18, %19 : vector<32x4xf32>
    %c0_5 = arith.constant 0 : index
    %c0_6 = arith.constant 0 : index
    %21 = vector.load %arg3[%c0_5, %c0_6] : memref<32x1xf32, #tpu.memory_space<vmem>>, vector<32x1xf32>
    %22 = vector.broadcast %21 : vector<32x1xf32> to vector<32x4xf32>
    %23 = arith.mulf %22, %20 : vector<32x4xf32>
    %cst_7 = arith.constant dense<0.000000e+00> : vector<4xf32>
    %24 = vector.multi_reduction <add>, %23, %cst_7 [0] : vector<32x4xf32> to vector<4xf32>
    %25 = vector.shape_cast %24 : vector<4xf32> to vector<1x4xf32>
    %c0_8 = arith.constant 0 : index
    %c0_9 = arith.constant 0 : index
    %26 = vector.load %arg4[%c0_8, %c0_9] : memref<1x1xf32, #tpu.memory_space<vmem>>, vector<1x1xf32>
    %27 = vector.broadcast %26 : vector<1x1xf32> to vector<1x4xf32>
    %28 = arith.addf %25, %27 : vector<1x4xf32>
    %29 = arith.negf %28 : vector<1x4xf32>
    %30 = math.exp %29 : vector<1x4xf32>
    %cst_10 = arith.constant 1.000000e+00 : f32
    %31 = vector.broadcast %cst_10 : f32 to vector<1x4xf32>
    %32 = arith.addf %31, %30 : vector<1x4xf32>
    %33 = arith.divf %31, %32 : vector<1x4xf32>
    %c0_11 = arith.constant 0 : index
    %c0_12 = arith.constant 0 : index
    %34 = vector.load %arg5[%c0_11, %c0_12] : memref<1x4xf32, #tpu.memory_space<vmem>>, vector<1x4xf32>
    tpu.vector_store %arg5[%c0_11, %c0_12], %33 {strides = array<i32>} : memref<1x4xf32, #tpu.memory_space<vmem>>, vector<1x4xf32>,
    return
  }
}

</mosaic_0001>

<llo_original>
// kernel: hello_xor_forward.1
$region0: #{hello_xor_forward.1}
  #allocation0 [shape = 'u32[]', space=smem, size = 0x4, offset = 0x4, fixed_abs, tag = 'smem constant byte address 0x4 - core index']
  #allocation1 [shape = 'u32[72,128]{1,0:T(1,128)}', space=vmem, size = 0x9000, scoped, tag = 'internal scratch']
  #allocation2 [shape = 'f32[1,1]{1,0:T(1,128)S(1)}', space=vmem, size = 0x200, scoped, tag = 'scoped memory for hello_xor_forward.1']
  %s0 = inlined_call_operand.vmem [shape: f32[2,4], index: 0, kind: input, shape index: {}]
  %s1 = inlined_call_operand.vmem [shape: f32[32,2], index: 1, kind: input, shape index: {}]
  %s2 = inlined_call_operand.vmem [shape: f32[32,1], index: 2, kind: input, shape index: {}]
  %s3 = inlined_call_operand.vmem [shape: f32[32,1], index: 3, kind: input, shape index: {}]
  %s4 = inlined_call_operand.<no memory space> [shape: f32[1,1], index: 4, kind: input, shape index: {}]
  %s5 = inlined_call_operand.hbm [shape: f32[1,4], index: 5, kind: output, shape index: {}]
  %s6 = sld [smem:[#allocation0]]
  $region30: #{hello_xor_forward.1} parent=0
    _
  %s8 = ssub.s32 1, %s6
  %s9 = scalar_select 0, %s8, %s6
  %v10 = vstv %s4
  %11 = vst [vmem:[#allocation2] sm:$0x1] %v10
  $region1: #{hello_xor_forward.1} parent=0
    #allocation3 [shape = 'u8[512]{0}', space=vmem, size = 0x400, scoped, tag = 'output window, operand 0, single buffered']
    #allocation4 [shape = 's32[1]{0}', space=sflag, size = 0x4, scoped, tag = 'scoped memory for hello_xor_forward.1']
    %12 = vsyncpa [#allocation4], 0
    // Predicated region
    $region2: #{hello_xor_forward.1} parent=1 // pred_check
      _
    $region3: #{hello_xor_forward.1} parent=1 // pred_check_branch
      %14 = sbr.rel (0) target = $region5
    $region4: #{hello_xor_forward.1} parent=1 // pred_region
      _
    $region5: #{hello_xor_forward.1} parent=1 // pred_fallthru
      _
    // Predicated region
    $region6: #{hello_xor_forward.1} parent=1 // pred_check
      _
    $region7: #{hello_xor_forward.1} parent=1 // pred_check_branch
      %16 = sbr.rel (0) target = $region9
    $region8: #{hello_xor_forward.1} parent=1 // pred_region
      _
    $region9: #{hello_xor_forward.1} parent=1 // pred_fallthru
      _
    // Predicated region
    $region10: #{hello_xor_forward.1} parent=1 // pred_check
      _
    $region11: #{hello_xor_forward.1} parent=1 // pred_check_branch
      %18 = sbr.rel (0) target = $region13
    $region12: #{hello_xor_forward.1} parent=1 // pred_region
      _
    $region13: #{hello_xor_forward.1} parent=1 // pred_fallthru
      _
    // Predicated region
    $region14: #{hello_xor_forward.1} parent=1 // pred_check
      _
    $region15: #{hello_xor_forward.1} parent=1 // pred_check_branch
      %20 = sbr.rel (0) target = $region17
    $region16: #{hello_xor_forward.1} parent=1 // pred_region
      _
    $region17: #{hello_xor_forward.1} parent=1 // pred_fallthru
      _
    // Predicated region
    $region18: #{hello_xor_forward.1} parent=1 // pred_check
      _
    $region19: #{hello_xor_forward.1} parent=1 // pred_check_branch
      %22 = sbr.rel (0) target = $region21
    $region20: #{hello_xor_forward.1} parent=1 // pred_region
      _
    $region21: #{hello_xor_forward.1} parent=1 // pred_fallthru
      _
    %v23 = vld [vmem:[%s0] sm:$0x3]
    %v24 = vld [vmem:[%s1] sm:$0xff]
    %v25 = vld [vmem:[%s1 + $0x8] sm:$0xff]
    %v26 = vld [vmem:[%s1 + $0x10] sm:$0xff]
    %v27 = vld [vmem:[%s1 + $0x18] sm:$0xff]
    %29 = vset.pattern.permute.xlu0 0
    %30 = vperm.xlu0 %29, %v24
    %v31 = vpop.permute.xlu0 %30
    %34 = vset.pattern.permute.xlu0 0
    %35 = vperm.xlu0 %34, %v25
    %v36 = vpop.permute.xlu0 %35
    %39 = vset.pattern.permute.xlu0 0
    %40 = vperm.xlu0 %39, %v26
    %v41 = vpop.permute.xlu0 %40
    %44 = vset.pattern.permute.xlu0 0
    %45 = vperm.xlu0 %44, %v27
    %v46 = vpop.permute.xlu0 %45
    %v48 = vperm.slane %v23, 0
    %v49 = vmul.f32 %v31, %v48
    %v50 = vmul.f32 %v36, %v48
    %v51 = vmul.f32 %v41, %v48
    %v52 = vmul.f32 %v46, %v48
    %53 = vset.pattern.permute.xlu0 1
    %54 = vperm.xlu0 %53, %v24
    %v55 = vpop.permute.xlu0 %54
    %57 = vset.pattern.permute.xlu0 1
    %58 = vperm.xlu0 %57, %v25
    %v59 = vpop.permute.xlu0 %58
    %61 = vset.pattern.permute.xlu0 1
    %62 = vperm.xlu0 %61, %v26
    %v63 = vpop.permute.xlu0 %62
    %65 = vset.pattern.permute.xlu0 1
    %66 = vperm.xlu0 %65, %v27
    %v67 = vpop.permute.xlu0 %66
    %v69 = vperm.slane %v23, 1
    %v70 = vmul.f32 %v55, %v69
    %v71 = vmul.f32 %v59, %v69
    %v72 = vmul.f32 %v63, %v69
    %v73 = vmul.f32 %v67, %v69
    %v74 = vadd.f32 %v49, %v70
    %v75 = vadd.f32 %v50, %v71
    %v76 = vadd.f32 %v51, %v72
    %v77 = vadd.f32 %v52, %v73
    %v78 = vld [vmem:[%s2] sm:$0xff]
    %v79 = vld [vmem:[%s2 + $0x8] sm:$0xff]
    %v80 = vld [vmem:[%s2 + $0x10] sm:$0xff]
    %v81 = vld [vmem:[%s2 + $0x18] sm:$0xff]
    %83 = vset.pattern.permute.xlu0 0
    %84 = vperm.xlu0 %83, %v78
    %v85 = vpop.permute.xlu0 %84
    %88 = vset.pattern.permute.xlu0 0
    %89 = vperm.xlu0 %88, %v79
    %v90 = vpop.permute.xlu0 %89
    %93 = vset.pattern.permute.xlu0 0
    %94 = vperm.xlu0 %93, %v80
    %v95 = vpop.permute.xlu0 %94
    %98 = vset.pattern.permute.xlu0 0
    %99 = vperm.xlu0 %98, %v81
    %v100 = vpop.permute.xlu0 %99
    %v102 = vadd.f32 %v74, %v85
    %v103 = vadd.f32 %v75, %v90
    %v104 = vadd.f32 %v76, %v95
    %v105 = vadd.f32 %v77, %v100
    %v106 = vxor.u32 %v102, 2147483648
    %v107 = vxor.u32 %v103, 2147483648
    %v108 = vxor.u32 %v104, 2147483648
    %v109 = vxor.u32 %v105, 2147483648
    %v110 = vmul.f32 %v106, 1.442695
    %v111 = vpow.pop %v110
    %v112 = vmul.f32 %v107, 1.442695
    %v113 = vpow.pop %v112
    %v114 = vmul.f32 %v108, 1.442695
    %v115 = vpow.pop %v114
    %v116 = vmul.f32 %v109, 1.442695
    %v117 = vpow.pop %v116
    %v118 = vadd.f32 %v111, 1.0
    %v119 = vadd.f32 %v113, 1.0
    %v120 = vadd.f32 %v115, 1.0
    %v121 = vadd.f32 %v117, 1.0
    %v122 = vrcp.pop %v118
    %v123 = vmul.f32 %v118, %v122
    %v124 = vsub.f32 1.0, %v123
    %v125 = vmul.f32 %v122, %v124
    %v126 = vadd.f32 %v122, %v125
    %vm127 = vweird.f32 %v118
    %vm128 = vweird.f32 %v122
    %vm129 = vmor %vm127, %vm128
    %v130 = vsel %vm129, %v122, %v126
    %v131 = vand.u32 2147483647, %v118
    %vm132 = vcmp.eq.f32.partialorder %v131, 8.507059e+37
    %v133 = vand.u32 %v118, 2147483648
    %v134 = vor.u32 1.1754944e-38, %v133
    %v135 = vsel %vm132, %v134, %v130
    %v136 = vmul.f32 1.0, %v135
    %v137 = vrcp.pop %v119
    %v138 = vmul.f32 %v119, %v137
    %v139 = vsub.f32 1.0, %v138
    %v140 = vmul.f32 %v137, %v139
    %v141 = vadd.f32 %v137, %v140
    %vm142 = vweird.f32 %v119
    %vm143 = vweird.f32 %v137
    %vm144 = vmor %vm142, %vm143
    %v145 = vsel %vm144, %v137, %v141
    %v146 = vand.u32 2147483647, %v119
    %vm147 = vcmp.eq.f32.partialorder %v146, 8.507059e+37
    %v148 = vand.u32 %v119, 2147483648
    %v149 = vor.u32 1.1754944e-38, %v148
    %v150 = vsel %vm147, %v149, %v145
    %v151 = vmul.f32 1.0, %v150
    %v152 = vrcp.pop %v120
    %v153 = vmul.f32 %v120, %v152
    %v154 = vsub.f32 1.0, %v153
    %v155 = vmul.f32 %v152, %v154
    %v156 = vadd.f32 %v152, %v155
    %vm157 = vweird.f32 %v120
    %vm158 = vweird.f32 %v152
    %vm159 = vmor %vm157, %vm158
    %v160 = vsel %vm159, %v152, %v156
    %v161 = vand.u32 2147483647, %v120
    %vm162 = vcmp.eq.f32.partialorder %v161, 8.507059e+37
    %v163 = vand.u32 %v120, 2147483648
    %v164 = vor.u32 1.1754944e-38, %v163
    %v165 = vsel %vm162, %v164, %v160
    %v166 = vmul.f32 1.0, %v165
    %v167 = vrcp.pop %v121
    %v168 = vmul.f32 %v121, %v167
    %v169 = vsub.f32 1.0, %v168
    %v170 = vmul.f32 %v167, %v169
    %v171 = vadd.f32 %v167, %v170
    %vm172 = vweird.f32 %v121
    %vm173 = vweird.f32 %v167
    %vm174 = vmor %vm172, %vm173
    %v175 = vsel %vm174, %v167, %v171
    %v176 = vand.u32 2147483647, %v121
    %vm177 = vcmp.eq.f32.partialorder %v176, 8.507059e+37
    %v178 = vand.u32 %v121, 2147483648
    %v179 = vor.u32 1.1754944e-38, %v178
    %v180 = vsel %vm177, %v179, %v175
    %v181 = vmul.f32 1.0, %v180
    %v182 = vld [vmem:[%s3] sm:$0xff]
    %v183 = vld [vmem:[%s3 + $0x8] sm:$0xff]
    %v184 = vld [vmem:[%s3 + $0x10] sm:$0xff]
    %v185 = vld [vmem:[%s3 + $0x18] sm:$0xff]
    %187 = vset.pattern.permute.xlu0 0
    %188 = vperm.xlu0 %187, %v182
    %v189 = vpop.permute.xlu0 %188
    %192 = vset.pattern.permute.xlu0 0
    %193 = vperm.xlu0 %192, %v183
    %v194 = vpop.permute.xlu0 %193
    %197 = vset.pattern.permute.xlu0 0
    %198 = vperm.xlu0 %197, %v184
    %v199 = vpop.permute.xlu0 %198
    %202 = vset.pattern.permute.xlu0 0
    %203 = vperm.xlu0 %202, %v185
    %v204 = vpop.permute.xlu0 %203
    %v206 = vmul.f32 %v189, %v136
    %v207 = vmul.f32 %v194, %v151
    %v208 = vmul.f32 %v199, %v166
    %v209 = vmul.f32 %v204, %v181
    %vm210 = vcmask 31744
    %v211 = vsel %vm210, %v206, 0.0
    %v212 = vsel %vm210, %v207, 0.0
    %v213 = vadd.f32 %v211, %v212
    %v214 = vsel %vm210, %v208, 0.0
    %v215 = vadd.f32 %v213, %v214
    %v216 = vsel %vm210, %v209, 0.0
    %v217 = vadd.f32 %v215, %v216
    %v218 = vrot.slane %v217, 4
    %v219 = vadd.f32 %v217, %v218
    %v220 = vrot.slane %v219, 2
    %v221 = vadd.f32 %v219, %v220
    %v222 = vrot.slane %v221, 1
    %v223 = vadd.f32 %v221, %v222
    %v224 = vld [vmem:[#allocation2] sm:$0x1]
    %226 = vset.pattern.permute.xlu0 0
    %227 = vperm.xlu0 %226, %v224
    %v228 = vpop.permute.xlu0 %227
    %v230 = vperm.slane %v228, 0
    %v231 = vadd.f32 %v223, %v230
    %v232 = vxor.u32 %v231, 2147483648
    %v233 = vmul.f32 %v232, 1.442695
    %v234 = vpow.pop %v233
    %v235 = vadd.f32 %v234, 1.0
    %v236 = vrcp.pop %v235
    %v237 = vmul.f32 %v235, %v236
    %v238 = vsub.f32 1.0, %v237
    %v239 = vmul.f32 %v236, %v238
    %v240 = vadd.f32 %v236, %v239
    %vm241 = vweird.f32 %v235
    %vm242 = vweird.f32 %v236
    %vm243 = vmor %vm241, %vm242
    %v244 = vsel %vm243, %v236, %v240
    %v245 = vand.u32 2147483647, %v235
    %vm246 = vcmp.eq.f32.partialorder %v245, 8.507059e+37
    %v247 = vand.u32 %v235, 2147483648
    %v248 = vor.u32 1.1754944e-38, %v247
    %v249 = vsel %vm246, %v248, %v244
    %v250 = vmul.f32 1.0, %v249
    %vm251 = vcmask 24576
    %252 = vst.msk [vmem:[#allocation3] sm:$0x1] %vm251, %v250
    // Predicated region
    $region22: #{hello_xor_forward.1} parent=1 // pred_check
      _
    $region23: #{hello_xor_forward.1} parent=1 // pred_check_branch
      %254 = sbr.rel (0) target = $region25
    $region24: #{hello_xor_forward.1} parent=1 // pred_region
      %256 = vsyncadd [#allocation4], 0
      %s258 = sshll.u32 [#allocation3], 4
      %s259 = int_to_ptr.vmem [resolvable:$true] %s258
      %s260 = sshll.u32 %s5, 4
      %s261 = int_to_ptr.hbm [resolvable:$true] %s260
      %263 = dma.vmem_to_hbm [thread:$0]  %s259, 16, %s261, [#allocation4]
    $region25: #{hello_xor_forward.1} parent=1 // pred_fallthru
      _
    // Predicated region
    $region26: #{hello_xor_forward.1} parent=1 // pred_check
      _
    $region27: #{hello_xor_forward.1} parent=1 // pred_check_branch
      %265 = sbr.rel (0) target = $region29
    $region28: #{hello_xor_forward.1} parent=1 // pred_region
      %267 = dma.done [#allocation4], 16
    $region29: #{hello_xor_forward.1} parent=1 // pred_fallthru
      _
    %268 = vsyncpa [#allocation4], 1

</llo_original>
